<compile_context>
chip_gen: v7x
topology: tpu7x:2x2x1
jax: 0.10.0
libtpu: 0.0.40
codegen_flags: <defaults>
</compile_context>

<pallas_src>
import jax
import jax.numpy as jnp
from jax.experimental import pallas as pl
from jax.experimental.pallas import tpu as pltpu


def _binned_embedding_kernel(x_ref, bias_ref, coef_ref, o_ref):
    """One grid step: (1, TN) values -> (d, TN) tanh-binned embeddings."""
    x = x_ref[...]          # (1, TN)  lane-dense input values
    b = bias_ref[...]       # (d, 1)   bin centers (resident across the grid)
    c = coef_ref[...]       # (d, 1)   exp2(weight), folded on the host
    # Single vectorized broadcast (1,TN) x (d,1) -> (d,TN); every output row
    # is a full lane-dense vector, tanh goes to the EUP slot.
    o_ref[...] = jnp.tanh((x - b) * c)


def binned_embedding_forward(x, weight, bias, *, tile_n=8192):
    """Pallas-backed BinnedEmbedding.forward.

    x: any shape (float).  weight: (1, d_model).  bias: (d_model,).
    Returns (*x.shape, d_model), float32.
    """
    weight = jnp.asarray(weight, jnp.float32)
    bias = jnp.asarray(bias, jnp.float32)
    d = weight.shape[-1]

    orig_shape = x.shape
    flat = jnp.asarray(x, jnp.float32).reshape(1, -1)   # (1, N) — free reshape
    n = flat.shape[1]

    # Fold exp2(weight) on the host (one tiny (1,d) op) and present params as
    # (d, 1) columns so the in-kernel broadcast runs along lanes.
    coef_col = jnp.exp2(weight).reshape(d, 1)
    bias_col = bias.reshape(d, 1)

    # Lane tile: multiple of 128 (or the full extent for tiny inputs); cap the
    # per-buffer output block at ~4 MiB so double buffering stays comfortably
    # inside scoped VMEM on every generation, even for large d_model.
    if tile_n % 128 != 0:
        raise ValueError("tile_n must be a multiple of 128")
    vmem_cap_lanes = max(128, ((4 * 1024 * 1024) // (4 * d)) // 128 * 128)
    tile = min(tile_n, vmem_cap_lanes)
    if n <= tile:
        tile = n                      # single block == full array dims (legal)
    num_blocks = pl.cdiv(n, tile)     # partial tail block is masked by Pallas

    out_t = pl.pallas_call(
        _binned_embedding_kernel,
        out_shape=jax.ShapeDtypeStruct((d, n), jnp.float32),
        grid=(num_blocks,),
        in_specs=[
            pl.BlockSpec((1, tile), lambda i: (0, i)),   # x row, lane-dense
            pl.BlockSpec((d, 1), lambda i: (0, 0)),      # bias, resident
            pl.BlockSpec((d, 1), lambda i: (0, 0)),      # coef, resident
        ],
        out_specs=pl.BlockSpec((d, tile), lambda i: (0, i)),
        compiler_params=pltpu.CompilerParams(
            dimension_semantics=("parallel",)),          # v7x megacore shard
    )(flat, bias_col, coef_col)

    # Layout plumbing back to the PyTorch output layout (*x.shape, d).
    return out_t.T.reshape(*orig_shape, d)


def binned_embedding_reference(x, weight, bias):
    """Pure-JAX reference of BinnedEmbedding.forward (float32)."""
    x = jnp.asarray(x, jnp.float32)
    coef = jnp.exp2(jnp.asarray(weight, jnp.float32))            # (1, d)
    return jnp.tanh((x[..., None] - jnp.asarray(bias, jnp.float32)) * coef)


if __name__ == "__main__":
    d_model = 32
    extent = (0.0, 2100.0)

    key = jax.random.PRNGKey(0)
    k_x, k_w, k_x2 = jax.random.split(key, 3)

    # Parameters mirroring BinnedEmbedding.__init__.
    weight = 0.02 * jax.random.normal(k_w, (1, d_model), dtype=jnp.float32)
    bias = jnp.linspace(extent[0], extent[1], d_model, dtype=jnp.float32)

    # Small deterministic input (batch=2, seq=8), some values outside extent.
    x = jax.random.uniform(k_x, (2, 8), minval=-100.0, maxval=2300.0,
                           dtype=jnp.float32)

    out = jax.block_until_ready(binned_embedding_forward(x, weight, bias))
    ref = binned_embedding_reference(x, weight, bias)
    assert out.shape == (2, 8, d_model), out.shape
    assert jnp.allclose(out, ref, atol=1e-5, rtol=1e-5), \
        float(jnp.max(jnp.abs(out - ref)))

    # Second check: multi-block grid with a partial (masked) tail tile.
    x2 = jax.random.uniform(k_x2, (5, 250), minval=-100.0, maxval=2300.0,
                            dtype=jnp.float32)
    out2 = jax.block_until_ready(
        binned_embedding_forward(x2, weight, bias, tile_n=512))
    ref2 = binned_embedding_reference(x2, weight, bias)
    assert out2.shape == (5, 250, d_model), out2.shape
    assert jnp.allclose(out2, ref2, atol=1e-5, rtol=1e-5), \
        float(jnp.max(jnp.abs(out2 - ref2)))

    print("KERNEL_OK")
</pallas_src>

<mosaic_0001>
module attributes {stable_mosaic.version = 11 : i64} {
  func.func @_binned_embedding_kernel(%arg0: i32, %arg1: memref<1x16xf32, #tpu.memory_space<vmem>>, %arg2: memref<32x1xf32, #tpu.memory_space<vmem>>, %arg3: memref<32x1xf32, #tpu.memory_space<vmem>>, %arg4: memref<32x16xf32, #tpu.memory_space<vmem>>) attributes {dimension_semantics = [#tpu.dimension_semantics<parallel>], iteration_bounds = array<i64: 1>, scalar_prefetch = 0 : i64, scratch_operands = 0 : i64, tpu.core_type = #tpu.core_type<tc>, window_params = [{transform_indices = @transform_0, window_bounds = array<i64: 1, 16>}, {pipeline_mode = #tpu.pipeline_mode<synchronous>, transform_indices = @transform_1, window_bounds = array<i64: 32, 1>}, {pipeline_mode = #tpu.pipeline_mode<synchronous>, transform_indices = @transform_2, window_bounds = array<i64: 32, 1>}, {transform_indices = @transform_3, window_bounds = array<i64: 32, 16>}]} {
    %c0 = arith.constant 0 : index
    %c0_0 = arith.constant 0 : index
    %0 = vector.load %arg1[%c0, %c0_0] : memref<1x16xf32, #tpu.memory_space<vmem>>, vector<1x16xf32>
    %c0_1 = arith.constant 0 : index
    %c0_2 = arith.constant 0 : index
    %1 = vector.load %arg2[%c0_1, %c0_2] : memref<32x1xf32, #tpu.memory_space<vmem>>, vector<32x1xf32>
    %c0_3 = arith.constant 0 : index
    %c0_4 = arith.constant 0 : index
    %2 = vector.load %arg3[%c0_3, %c0_4] : memref<32x1xf32, #tpu.memory_space<vmem>>, vector<32x1xf32>
    %3 = vector.broadcast %0 : vector<1x16xf32> to vector<32x16xf32>
    %4 = vector.broadcast %1 : vector<32x1xf32> to vector<32x16xf32>
    %5 = arith.subf %3, %4 : vector<32x16xf32>
    %6 = vector.broadcast %2 : vector<32x1xf32> to vector<32x16xf32>
    %7 = arith.mulf %5, %6 : vector<32x16xf32>
    %8 = math.tanh %7 : vector<32x16xf32>
    %c0_5 = arith.constant 0 : index
    %c0_6 = arith.constant 0 : index
    %9 = vector.load %arg4[%c0_5, %c0_6] : memref<32x16xf32, #tpu.memory_space<vmem>>, vector<32x16xf32>
    tpu.vector_store %arg4[%c0_5, %c0_6], %8 {strides = array<i32>} : memref<32x16xf32, #tpu.memory_space<vmem>>, vector<32x16xf32>,
    return
  }
  func.func @transform_0(%arg0: i32) -> (i32, i32) {
    %c0_i32 = arith.constant 0 : i32
    %c0_i32_0 = arith.constant 0 : i32
    return %c0_i32, %arg0 : i32, i32
  }
  func.func @transform_1(%arg0: i32) -> (i32, i32) {
    %c0_i32 = arith.constant 0 : i32
    %c0_i32_0 = arith.constant 0 : i32
    %c0_i32_1 = arith.constant 0 : i32
    return %c0_i32, %c0_i32_0 : i32, i32
  }
  func.func @transform_2(%arg0: i32) -> (i32, i32) {
    %c0_i32 = arith.constant 0 : i32
    %c0_i32_0 = arith.constant 0 : i32
    %c0_i32_1 = arith.constant 0 : i32
    return %c0_i32, %c0_i32_0 : i32, i32
  }
  func.func @transform_3(%arg0: i32) -> (i32, i32) {
    %c0_i32 = arith.constant 0 : i32
    %c0_i32_0 = arith.constant 0 : i32
    return %c0_i32, %arg0 : i32, i32
  }
}

</mosaic_0001>

<llo_original>
// kernel: tpu_custom_call.1
$region0: #{tpu_custom_call.1}
  #allocation0 [shape = 'u32[]', space=smem, size = 0x4, offset = 0x4, fixed_abs, tag = 'smem constant byte address 0x4 - core index']
  #allocation1 [shape = 'u32[144,128]{1,0:T(1,128)}', space=vmem, size = 0x12000, scoped, tag = 'internal scratch']
  %s0 = inlined_call_operand.vmem [shape: f32[1,16], index: 0, kind: input, shape index: {}]
  %s1 = inlined_call_operand.vmem [shape: f32[32,1], index: 1, kind: input, shape index: {}]
  %s2 = inlined_call_operand.vmem [shape: f32[32,1], index: 2, kind: input, shape index: {}]
  %s3 = inlined_call_operand.vmem [shape: f32[32,16], index: 3, kind: output, shape index: {}]
  %s4 = sld [smem:[#allocation0]]
  $region22: #{tpu_custom_call.1} parent=0
    _
  %s6 = ssub.s32 1, %s4
  %s7 = scalar_select 0, %s6, %s4
  // Predicated region
  $region2: #{tpu_custom_call.1} parent=0 // pred_check
    _
  $region3: #{tpu_custom_call.1} parent=0 // pred_check_branch
    %9 = sbr.rel (0) target = $region5
  $region4: #{tpu_custom_call.1} parent=0 // pred_region
    _
  $region5: #{tpu_custom_call.1} parent=0 // pred_fallthru
    _
  // Predicated region
  $region6: #{tpu_custom_call.1} parent=0 // pred_check
    _
  $region7: #{tpu_custom_call.1} parent=0 // pred_check_branch
    %11 = sbr.rel (0) target = $region9
  $region8: #{tpu_custom_call.1} parent=0 // pred_region
    _
  $region9: #{tpu_custom_call.1} parent=0 // pred_fallthru
    _
  // Predicated region
  $region10: #{tpu_custom_call.1} parent=0 // pred_check
    _
  $region11: #{tpu_custom_call.1} parent=0 // pred_check_branch
    %13 = sbr.rel (0) target = $region13
  $region12: #{tpu_custom_call.1} parent=0 // pred_region
    _
  $region13: #{tpu_custom_call.1} parent=0 // pred_fallthru
    _
  %v14 = vld [vmem:[%s0] sm:$0x1]
  %v15 = vld [vmem:[%s1] sm:$0xff]
  %v16 = vld [vmem:[%s1 + $0x8] sm:$0xff]
  %v17 = vld [vmem:[%s1 + $0x10] sm:$0xff]
  %v18 = vld [vmem:[%s1 + $0x18] sm:$0xff]
  %v19 = vld [vmem:[%s2] sm:$0xff]
  %v20 = vld [vmem:[%s2 + $0x8] sm:$0xff]
  %v21 = vld [vmem:[%s2 + $0x10] sm:$0xff]
  %v22 = vld [vmem:[%s2 + $0x18] sm:$0xff]
  %v24 = vlaneseq
  %v25 = vshrl.u32 %v24, 7
  %v26 = vsub.s32 0, %v25
  %v27 = vrot.slane %v14, %v26
  %30 = vset.pattern.permute.xlu0 0
  %31 = vperm.xlu0 %30, %v15
  %v32 = vpop.permute.xlu0 %31
  %35 = vset.pattern.permute.xlu0 0
  %36 = vperm.xlu0 %35, %v16
  %v37 = vpop.permute.xlu0 %36
  %40 = vset.pattern.permute.xlu0 0
  %41 = vperm.xlu0 %40, %v17
  %v42 = vpop.permute.xlu0 %41
  %45 = vset.pattern.permute.xlu0 0
  %46 = vperm.xlu0 %45, %v18
  %v47 = vpop.permute.xlu0 %46
  %v49 = vsub.f32 %v27, %v32
  %v50 = vsub.f32 %v27, %v37
  %v51 = vsub.f32 %v27, %v42
  %v52 = vsub.f32 %v27, %v47
  %54 = vset.pattern.permute.xlu0 0
  %55 = vperm.xlu0 %54, %v19
  %v56 = vpop.permute.xlu0 %55
  %59 = vset.pattern.permute.xlu0 0
  %60 = vperm.xlu0 %59, %v20
  %v61 = vpop.permute.xlu0 %60
  %64 = vset.pattern.permute.xlu0 0
  %65 = vperm.xlu0 %64, %v21
  %v66 = vpop.permute.xlu0 %65
  %69 = vset.pattern.permute.xlu0 0
  %70 = vperm.xlu0 %69, %v22
  %v71 = vpop.permute.xlu0 %70
  %v73 = vmul.f32 %v49, %v56
  %v74 = vmul.f32 %v50, %v61
  %v75 = vmul.f32 %v51, %v66
  %v76 = vmul.f32 %v52, %v71
  %v77 = vtanh.pop %v73
  %v78 = vtanh.pop %v74
  %v79 = vtanh.pop %v75
  %v80 = vtanh.pop %v76
  %vm81 = vcmask 130048
  %82 = vst.msk [vmem:[%s3] sm:$0xff] %vm81, %v77
  %83 = vst.msk [vmem:[%s3 + $0x8] sm:$0xff] %vm81, %v78
  %84 = vst.msk [vmem:[%s3 + $0x10] sm:$0xff] %vm81, %v79
  %85 = vst.msk [vmem:[%s3 + $0x18] sm:$0xff] %vm81, %v80
  // Predicated region
  $region14: #{tpu_custom_call.1} parent=0 // pred_check
    _
  $region15: #{tpu_custom_call.1} parent=0 // pred_check_branch
    %87 = sbr.rel (0) target = $region17
  $region16: #{tpu_custom_call.1} parent=0 // pred_region
    _
  $region17: #{tpu_custom_call.1} parent=0 // pred_fallthru
    _
  // Predicated region
  $region18: #{tpu_custom_call.1} parent=0 // pred_check
    _
  $region19: #{tpu_custom_call.1} parent=0 // pred_check_branch
    %89 = sbr.rel (0) target = $region21
  $region20: #{tpu_custom_call.1} parent=0 // pred_region
    _
  $region21: #{tpu_custom_call.1} parent=0 // pred_fallthru
    _

</llo_original>
